<compile_context>
chip_gen: v5e
topology: v5e:2x2
jax: 0.10.0
libtpu: 0.0.40
codegen_flags: <defaults>
</compile_context>

<pallas_src>
import math

import jax
import jax.numpy as jnp
from jax.experimental import pallas as pl
from jax.experimental.pallas import tpu as pltpu

_LANE = 128
_SUBLANE = 8


def _round_up(x: int, m: int) -> int:
    return ((x + m - 1) // m) * m


def _wide_kernel(x_ref, w_ref, b_ref, o_ref, acc_ref):
    """One (batch-tile, vocab-tile) grid step.

    x_ref:   (tb, F)      int32  VMEM   X indices for this batch tile
    w_ref:   (tv, P_pad)  f32    VMEM   vocab slice of the embedding table
    b_ref:   (1, P_pad)   f32    VMEM   bias (grid-resident)
    o_ref:   (tb, P_pad)  f32    VMEM   output tile
    acc_ref: (tb, P_pad)  f32    VMEM   accumulator across vocab tiles
    """
    k = pl.program_id(1)

    @pl.when(k == 0)
    def _():
        acc_ref[...] = jnp.zeros_like(acc_ref)

    x = x_ref[...]                                   # (tb, F) int32
    tb, n_feat = x.shape
    tv = w_ref.shape[0]

    # counts[b, v] = #{f : X[b, f] == k*tv + v}  -- F VPU compares, no scalar work.
    vocab_ids = jax.lax.broadcasted_iota(jnp.int32, (tb, tv), 1) + k * tv
    counts = jnp.zeros((tb, tv), jnp.float32)
    for f in range(n_feat):                          # F is small & static -> unrolled
        counts = counts + (vocab_ids == x[:, f:f + 1]).astype(jnp.float32)

    # Embedding-bag sum == counts @ W   (MXU, f32 accumulate).
    acc_ref[...] += jnp.dot(counts, w_ref[...], preferred_element_type=jnp.float32)

    @pl.when(k == pl.num_programs(1) - 1)
    def _():
        o_ref[...] = acc_ref[...] + b_ref[...]


def _vmem_capacity_bytes(default_bytes: int = 64 * 1024 * 1024) -> int:
    try:
        info = pltpu.get_tpu_info()
        return int(getattr(info, "vmem_capacity_bytes", default_bytes))
    except Exception:
        return default_bytes


def wide_forward(x, weight, bias, *, block_b: int = 512, block_v: int = 2048):
    """x: (B, F) int; weight: (V+1, P) float; bias: (P,) float  ->  (B, P) f32."""
    B, F = x.shape
    V1, P = weight.shape

    # ---- host-side layout prep (cheap XLA ops) ------------------------------
    # Clamp once here (matches jnp gather clamping) instead of per-element
    # clips on the kernel's scalar unit.
    x = jnp.clip(x.astype(jnp.int32), 0, V1 - 1)

    p_pad = _round_up(P, _LANE)                      # lane-dense loads/stores
    v_pad = _round_up(V1, _LANE)
    tv = min(_round_up(block_v, _LANE), v_pad)       # vocab tile (lane dim of counts)
    v_pad = _round_up(v_pad, tv)
    grid_v = v_pad // tv

    # Batch tile: multiple of 8 sublanes; prefer >= 2 tiles so the "parallel"
    # grid axis can feed both TensorCores on v7x.
    tb = min(_round_up(B, _SUBLANE), _round_up(block_b, _SUBLANE))
    if _round_up(B, tb) // tb < 2 and tb > _SUBLANE:
        tb = max(_SUBLANE, _round_up(tb // 2, _SUBLANE))
    b_pad = _round_up(B, tb)
    grid_b = b_pad // tb

    if b_pad != B:
        x = jnp.pad(x, ((0, b_pad - B), (0, 0)))     # padded rows sliced off below

    w_padded = jnp.zeros((v_pad, p_pad), jnp.float32)
    w_padded = w_padded.at[:V1, :P].set(weight.astype(jnp.float32))
    b_padded = jnp.zeros((1, p_pad), jnp.float32)
    b_padded = b_padded.at[0, :P].set(bias.astype(jnp.float32))

    # ---- VMEM budget from the (8,128)-padded layout --------------------------
    f_pad = _round_up(F, _LANE)
    w_bufs = 1 if grid_v == 1 else 2
    vmem_needed = (
        w_bufs * tv * p_pad * 4          # weight block(s)
        + _SUBLANE * p_pad * 4           # bias (single-buffered)
        + 2 * tb * f_pad * 4             # X tile (double-buffered, lane-padded)
        + 2 * tb * p_pad * 4             # output tile (double-buffered)
        + tb * p_pad * 4                 # accumulator scratch
        + 2 * tb * tv * 4                # counts intermediate headroom
        + (2 << 20)                      # misc compiler scratch headroom
    )
    vmem_limit = int(min(max(vmem_needed, 32 * 1024 * 1024),
                         int(0.9 * _vmem_capacity_bytes())))

    # Grid-resident blocks (constant index_map) need only a single buffer.
    bias_spec = pl.BlockSpec((1, p_pad), lambda i, k: (0, 0),
                             pipeline_mode=pl.Buffered(1))
    if grid_v == 1:
        w_spec = pl.BlockSpec((tv, p_pad), lambda i, k: (0, 0),
                              pipeline_mode=pl.Buffered(1))
    else:
        w_spec = pl.BlockSpec((tv, p_pad), lambda i, k: (k, 0))

    out = pl.pallas_call(
        _wide_kernel,
        out_shape=jax.ShapeDtypeStruct((b_pad, p_pad), jnp.float32),
        grid_spec=pltpu.PrefetchScalarGridSpec(
            num_scalar_prefetch=0,
            grid=(grid_b, grid_v),                   # reduction (vocab) axis last
            in_specs=[
                pl.BlockSpec((tb, F), lambda i, k: (i, 0)),   # X tile (VMEM)
                w_spec,                                        # vocab slice of W
                bias_spec,                                     # bias
            ],
            out_specs=pl.BlockSpec((tb, p_pad), lambda i, k: (i, 0)),
            scratch_shapes=[pltpu.VMEM((tb, p_pad), jnp.float32)],
        ),
        compiler_params=pltpu.CompilerParams(
            dimension_semantics=("parallel", "arbitrary"),
            vmem_limit_bytes=vmem_limit,
        ),
        cost_estimate=pl.CostEstimate(
            flops=2 * b_pad * v_pad * p_pad + b_pad * F * v_pad,
            transcendentals=0,
            bytes_accessed=(b_pad * F * 4 + v_pad * p_pad * 4
                            + p_pad * 4 + b_pad * p_pad * 4),
        ),
    )(x, w_padded, b_padded)

    return out[:B, :P]


def init_wide_params(key, input_dim, pred_dim=1):
    """Deterministic init mirroring Wide._reset_parameters (kaiming_uniform a=sqrt(5))."""
    kw, kb = jax.random.split(key)
    num_rows = input_dim + 1
    # kaiming_uniform_(a=sqrt(5)) on a (num_rows, pred_dim) tensor: fan_in = pred_dim
    fan_in = pred_dim
    gain = math.sqrt(2.0 / (1.0 + 5.0))
    w_bound = gain * math.sqrt(3.0 / fan_in)
    weight = jax.random.uniform(
        kw, (num_rows, pred_dim), jnp.float32, minval=-w_bound, maxval=w_bound
    )
    # padding_idx=0 -> row 0 of the embedding contributes zero.
    weight = weight.at[0].set(0.0)
    b_bound = 1.0 / math.sqrt(fan_in)
    bias = jax.random.uniform(
        kb, (pred_dim,), jnp.float32, minval=-b_bound, maxval=b_bound
    )
    return weight, bias


def wide_reference(x, weight, bias):
    """Pure-JAX reference: Embedding(X).sum(dim=1) + bias."""
    emb = weight[x.astype(jnp.int32)]          # (B, F, P)
    return emb.sum(axis=1) + bias[None, :]


if __name__ == "__main__":
    key = jax.random.PRNGKey(0)
    k_param, k_x, k_param2, k_x2 = jax.random.split(key, 4)

    # Test 1: canonical Wide setup (pred_dim=1).
    input_dim, pred_dim = 20, 1
    batch, n_features = 8, 4
    weight, bias = init_wide_params(k_param, input_dim, pred_dim)
    x = jax.random.randint(k_x, (batch, n_features), 0, input_dim + 1, dtype=jnp.int32)
    out = jax.block_until_ready(wide_forward(x, weight, bias))
    ref = wide_reference(x, weight, bias)
    assert out.shape == (batch, pred_dim)
    assert jnp.allclose(out, ref, atol=1e-5, rtol=1e-5), (out, ref)

    # Test 2: multi-class head + batch not a multiple of the sublane width.
    input_dim2, pred_dim2 = 37, 3
    batch2, n_features2 = 13, 5
    weight2, bias2 = init_wide_params(k_param2, input_dim2, pred_dim2)
    x2 = jax.random.randint(
        k_x2, (batch2, n_features2), 0, input_dim2 + 1, dtype=jnp.int32
    )
    out2 = jax.block_until_ready(wide_forward(x2, weight2, bias2))
    ref2 = wide_reference(x2, weight2, bias2)
    assert out2.shape == (batch2, pred_dim2)
    assert jnp.allclose(out2, ref2, atol=1e-5, rtol=1e-5), (out2, ref2)

    print("KERNEL_OK")
</pallas_src>

<mosaic_0001>
module attributes {stable_mosaic.version = 11 : i64} {
  func.func @_wide_kernel(%arg0: i32, %arg1: i32, %arg2: memref<8x4xi32, #tpu.memory_space<vmem>>, %arg3: memref<128x128xf32, #tpu.memory_space<vmem>>, %arg4: memref<1x128xf32, #tpu.memory_space<vmem>>, %arg5: memref<8x128xf32, #tpu.memory_space<vmem>>, %arg6: memref<8x128xf32, #tpu.memory_space<vmem>>) attributes {dimension_semantics = [#tpu.dimension_semantics<parallel>, #tpu.dimension_semantics<arbitrary>], iteration_bounds = array<i64: 1, 1>, scalar_prefetch = 0 : i64, scratch_operands = 1 : i64, tpu.core_type = #tpu.core_type<tc>, window_params = [{transform_indices = @transform_0, window_bounds = array<i64: 8, 4>}, {pipeline_mode = #tpu.pipeline_mode<synchronous>, transform_indices = @transform_1, window_bounds = array<i64: 128, 128>}, {pipeline_mode = #tpu.pipeline_mode<synchronous>, transform_indices = @transform_2, window_bounds = array<i64: 1, 128>}, {transform_indices = @transform_3, window_bounds = array<i64: 8, 128>}]} {
    %c0_i32 = arith.constant 0 : i32
    %0 = arith.cmpi eq, %arg1, %c0_i32 : i32
    %1 = arith.extui %0 : i1 to i32
    %c0_i32_0 = arith.constant 0 : i32
    %2 = arith.cmpi ne, %1, %c0_i32_0 : i32
    scf.if %2 {
      %cst_11 = arith.constant 0.000000e+00 : f32
      %41 = vector.broadcast %cst_11 : f32 to vector<8x128xf32>
      %c0_12 = arith.constant 0 : index
      %c0_13 = arith.constant 0 : index
      %42 = vector.load %arg6[%c0_12, %c0_13] : memref<8x128xf32, #tpu.memory_space<vmem>>, vector<8x128xf32>
      tpu.vector_store %arg6[%c0_12, %c0_13], %41 {strides = array<i32>} : memref<8x128xf32, #tpu.memory_space<vmem>>, vector<8x128xf32>,
    } else {
    }
    %c0 = arith.constant 0 : index
    %c0_1 = arith.constant 0 : index
    %3 = vector.load %arg2[%c0, %c0_1] : memref<8x4xi32, #tpu.memory_space<vmem>>, vector<8x4xi32>
    %4 = tpu.iota {dimensions = array<i32: 1>} : vector<8x128xi32>
    %c128_i32 = arith.constant 128 : i32
    %5 = arith.muli %arg1, %c128_i32 : i32
    %6 = vector.broadcast %5 : i32 to vector<8x128xi32>
    %7 = arith.addi %4, %6 : vector<8x128xi32>
    %cst = arith.constant 0.000000e+00 : f32
    %8 = vector.broadcast %cst : f32 to vector<8x128xf32>
    %9 = vector.extract_strided_slice %3 {offsets = [0, 0], sizes = [8, 1], strides = [1, 1]} : vector<8x4xi32> to vector<8x1xi32>
    %10 = vector.broadcast %9 : vector<8x1xi32> to vector<8x128xi32>
    %11 = arith.cmpi eq, %7, %10 : vector<8x128xi32>
    %12 = arith.extui %11 : vector<8x128xi1> to vector<8x128xi32>
    %13 = arith.sitofp %12 : vector<8x128xi32> to vector<8x128xf32>
    %14 = arith.addf %8, %13 : vector<8x128xf32>
    %15 = vector.extract_strided_slice %3 {offsets = [0, 1], sizes = [8, 1], strides = [1, 1]} : vector<8x4xi32> to vector<8x1xi32>
    %16 = vector.broadcast %15 : vector<8x1xi32> to vector<8x128xi32>
    %17 = arith.cmpi eq, %7, %16 : vector<8x128xi32>
    %18 = arith.extui %17 : vector<8x128xi1> to vector<8x128xi32>
    %19 = arith.sitofp %18 : vector<8x128xi32> to vector<8x128xf32>
    %20 = arith.addf %14, %19 : vector<8x128xf32>
    %21 = vector.extract_strided_slice %3 {offsets = [0, 2], sizes = [8, 1], strides = [1, 1]} : vector<8x4xi32> to vector<8x1xi32>
    %22 = vector.broadcast %21 : vector<8x1xi32> to vector<8x128xi32>
    %23 = arith.cmpi eq, %7, %22 : vector<8x128xi32>
    %24 = arith.extui %23 : vector<8x128xi1> to vector<8x128xi32>
    %25 = arith.sitofp %24 : vector<8x128xi32> to vector<8x128xf32>
    %26 = arith.addf %20, %25 : vector<8x128xf32>
    %27 = vector.extract_strided_slice %3 {offsets = [0, 3], sizes = [8, 1], strides = [1, 1]} : vector<8x4xi32> to vector<8x1xi32>
    %28 = vector.broadcast %27 : vector<8x1xi32> to vector<8x128xi32>
    %29 = arith.cmpi eq, %7, %28 : vector<8x128xi32>
    %30 = arith.extui %29 : vector<8x128xi1> to vector<8x128xi32>
    %31 = arith.sitofp %30 : vector<8x128xi32> to vector<8x128xf32>
    %32 = arith.addf %26, %31 : vector<8x128xf32>
    %c0_2 = arith.constant 0 : index
    %c0_3 = arith.constant 0 : index
    %33 = vector.load %arg6[%c0_2, %c0_3] : memref<8x128xf32, #tpu.memory_space<vmem>>, vector<8x128xf32>
    %c0_4 = arith.constant 0 : index
    %c0_5 = arith.constant 0 : index
    %34 = vector.load %arg3[%c0_4, %c0_5] : memref<128x128xf32, #tpu.memory_space<vmem>>, vector<128x128xf32>
    %cst_6 = arith.constant dense<0.000000e+00> : vector<8x128xf32>
    %35 = tpu.matmul %32, %34, %cst_6 {dimension_numbers = #tpu.dot_dimension_numbers<[1], [0], [0], [1], [0, 0, 1, 1], [], []>} : vector<8x128xf32>, vector<128x128xf32>, vector<8x128xf32> -> vector<8x128xf32>
    %36 = arith.addf %33, %35 : vector<8x128xf32>
    %c0_7 = arith.constant 0 : index
    %c0_8 = arith.constant 0 : index
    %37 = vector.load %arg6[%c0_7, %c0_8] : memref<8x128xf32, #tpu.memory_space<vmem>>, vector<8x128xf32>
    tpu.vector_store %arg6[%c0_7, %c0_8], %36 {strides = array<i32>} : memref<8x128xf32, #tpu.memory_space<vmem>>, vector<8x128xf32>,
    %c0_i32_9 = arith.constant 0 : i32
    %38 = arith.cmpi eq, %arg1, %c0_i32_9 : i32
    %39 = arith.extui %38 : i1 to i32
    %c0_i32_10 = arith.constant 0 : i32
    %40 = arith.cmpi ne, %39, %c0_i32_10 : i32
    scf.if %40 {
      %c0_11 = arith.constant 0 : index
      %c0_12 = arith.constant 0 : index
      %41 = vector.load %arg6[%c0_11, %c0_12] : memref<8x128xf32, #tpu.memory_space<vmem>>, vector<8x128xf32>
      %c0_13 = arith.constant 0 : index
      %c0_14 = arith.constant 0 : index
      %42 = vector.load %arg4[%c0_13, %c0_14] : memref<1x128xf32, #tpu.memory_space<vmem>>, vector<1x128xf32>
      %43 = vector.broadcast %42 : vector<1x128xf32> to vector<8x128xf32>
      %44 = arith.addf %41, %43 : vector<8x128xf32>
      %c0_15 = arith.constant 0 : index
      %c0_16 = arith.constant 0 : index
      %45 = vector.load %arg5[%c0_15, %c0_16] : memref<8x128xf32, #tpu.memory_space<vmem>>, vector<8x128xf32>
      tpu.vector_store %arg5[%c0_15, %c0_16], %44 {strides = array<i32>} : memref<8x128xf32, #tpu.memory_space<vmem>>, vector<8x128xf32>,
    } else {
    }
    return
  }
  func.func @transform_0(%arg0: i32, %arg1: i32) -> (i32, i32) {
    %c0_i32 = arith.constant 0 : i32
    %c0_i32_0 = arith.constant 0 : i32
    return %arg0, %c0_i32 : i32, i32
  }
  func.func @transform_1(%arg0: i32, %arg1: i32) -> (i32, i32) {
    %c0_i32 = arith.constant 0 : i32
    %c0_i32_0 = arith.constant 0 : i32
    %c0_i32_1 = arith.constant 0 : i32
    return %c0_i32, %c0_i32_0 : i32, i32
  }
  func.func @transform_2(%arg0: i32, %arg1: i32) -> (i32, i32) {
    %c0_i32 = arith.constant 0 : i32
    %c0_i32_0 = arith.constant 0 : i32
    %c0_i32_1 = arith.constant 0 : i32
    return %c0_i32, %c0_i32_0 : i32, i32
  }
  func.func @transform_3(%arg0: i32, %arg1: i32) -> (i32, i32) {
    %c0_i32 = arith.constant 0 : i32
    %c0_i32_0 = arith.constant 0 : i32
    return %arg0, %c0_i32 : i32, i32
  }
}

</mosaic_0001>

<llo_original>
// kernel: tpu_custom_call.1
$region0: #{tpu_custom_call.1}
  #allocation0 [shape = 'u32[]', space=smem, size = 0x4, offset = 0x4, fixed_abs, tag = 'smem constant byte address 0x4 - core index']
  #allocation1 [shape = 'u32[72,128]{1,0:T(1,128)}', space=vmem, size = 0x9000, scoped, tag = 'internal scratch']
  #allocation2 [shape = 'f32[8,128]{1,0:T(8,128)}', space=vmem, size = 0x1000, scoped, tag = 'scratch operand']
  %s0 = inlined_call_operand.vmem [shape: s32[8,4], index: 0, kind: input, shape index: {}]
  %s1 = inlined_call_operand.hbm [shape: f32[128,128], index: 1, kind: input, shape index: {}]
  %s2 = inlined_call_operand.vmem [shape: f32[1,128], index: 2, kind: input, shape index: {}]
  %s3 = inlined_call_operand.hbm [shape: f32[8,128], index: 3, kind: output, shape index: {}]
  %s4 = sld [smem:[#allocation0]]
  $region34: #{tpu_custom_call.1} parent=0
    _
  %s6 = ssub.s32 1, %s4
  %s7 = scalar_select 0, %s6, %s4
  $region1: #{tpu_custom_call.1} parent=0
    #allocation3 [shape = 'u8[65536]{0}', space=vmem, size = 0x10000, scoped, tag = 'input window, operand 1, single buffered']
    #allocation4 [shape = 's32[1]{0}', space=sflag, size = 0x4, scoped, tag = 'scoped memory for tpu_custom_call.1']
    #allocation5 [shape = 's32[1]{0}', space=sflag, size = 0x4, scoped, tag = 'scoped memory for tpu_custom_call.1']
    #allocation6 [shape = 'u8[4096]{0}', space=vmem, size = 0x1000, scoped, tag = 'output window, operand 0, single buffered']
    %8 = vsyncpa [#allocation4], 0
    %9 = vsyncpa [#allocation5], 0
    // Predicated region
    $region2: #{tpu_custom_call.1} parent=1 // pred_check
      _
    $region3: #{tpu_custom_call.1} parent=1 // pred_check_branch
      %11 = sbr.rel (0) target = $region5
    $region4: #{tpu_custom_call.1} parent=1 // pred_region
      _
    $region5: #{tpu_custom_call.1} parent=1 // pred_fallthru
      _
    // Predicated region
    $region6: #{tpu_custom_call.1} parent=1 // pred_check
      _
    $region7: #{tpu_custom_call.1} parent=1 // pred_check_branch
      %13 = sbr.rel (0) target = $region9
    $region8: #{tpu_custom_call.1} parent=1 // pred_region
      %15 = vsyncadd [#allocation4], 0
      %s16 = sshll.u32 %s1, 4
      %s17 = int_to_ptr.hbm [resolvable:$true] %s16
      %s18 = sshll.u32 [#allocation3], 4
      %s19 = int_to_ptr.vmem [resolvable:$true] %s18
      %24 = dma.hbm_to_vmem [thread:$0]  %s17, 2048, %s19, [#allocation4], 128, 128, 8
    $region9: #{tpu_custom_call.1} parent=1 // pred_fallthru
      _
    // Predicated region
    $region10: #{tpu_custom_call.1} parent=1 // pred_check
      _
    $region11: #{tpu_custom_call.1} parent=1 // pred_check_branch
      %26 = sbr.rel (0) target = $region13
    $region12: #{tpu_custom_call.1} parent=1 // pred_region
      _
    $region13: #{tpu_custom_call.1} parent=1 // pred_fallthru
      _
    // Predicated region
    $region14: #{tpu_custom_call.1} parent=1 // pred_check
      _
    $region15: #{tpu_custom_call.1} parent=1 // pred_check_branch
      %28 = sbr.rel (0) target = $region17
    $region16: #{tpu_custom_call.1} parent=1 // pred_region
      %30 = dma.done [#allocation4], 2048
    $region17: #{tpu_custom_call.1} parent=1 // pred_fallthru
      _
    %p31 = scmp.eq.s32.totalorder 0, 0
    // Predicated region
    $region18: #{tpu_custom_call.1} parent=1 // pred_check
      %p32 = pneg %p31
    $region19: #{tpu_custom_call.1} parent=1 // pred_check_branch
      %34 = sbr.rel (%p32) target = $region21
    $region20: #{tpu_custom_call.1} parent=1 // pred_region
      %35 = vst [vmem:[#allocation2] sm:$0xff] 0.0
    $region21: #{tpu_custom_call.1} parent=1 // pred_fallthru
      _
    %v36 = vld [vmem:[%s0] sm:$0xff]
    %v37 = vlaneseq
    %v38 = vand.u32 %v37, 127
    %s39 = smul.u32 0, 128
    %v40 = vstv %s39
    %v41 = vadd.s32 %v38, %v40
    %42 = vset.pattern.permute.xlu0 0
    %43 = vperm.xlu0 %42, %v36
    %v44 = vpop.permute.xlu0 %43
    %vm45 = vcmp.eq.s32.totalorder %v41, %v44
    %v46 = vsel %vm45, 1, 0
    %v47 = vcvt.s32.f32 %v46
    %v48 = vadd.f32 %v47, 0.0
    %49 = vset.pattern.permute.xlu0 1
    %50 = vperm.xlu0 %49, %v36
    %v51 = vpop.permute.xlu0 %50
    %vm52 = vcmp.eq.s32.totalorder %v41, %v51
    %v53 = vsel %vm52, 1, 0
    %v54 = vcvt.s32.f32 %v53
    %v55 = vadd.f32 %v48, %v54
    %56 = vset.pattern.permute.xlu0 2
    %57 = vperm.xlu0 %56, %v36
    %v58 = vpop.permute.xlu0 %57
    %vm59 = vcmp.eq.s32.totalorder %v41, %v58
    %v60 = vsel %vm59, 1, 0
    %v61 = vcvt.s32.f32 %v60
    %v62 = vadd.f32 %v55, %v61
    %63 = vset.pattern.permute.xlu0 3
    %64 = vperm.xlu0 %63, %v36
    %v65 = vpop.permute.xlu0 %64
    %vm66 = vcmp.eq.s32.totalorder %v41, %v65
    %v67 = vsel %vm66, 1, 0
    %v68 = vcvt.s32.f32 %v67
    %v69 = vadd.f32 %v62, %v68
    %v70 = vld [vmem:[#allocation2] sm:$0xff]
    %v71 = vld [vmem:[#allocation3] sm:$0xff]
    %v72 = vld [vmem:[#allocation3 + $0x8] sm:$0xff]
    %v73 = vld [vmem:[#allocation3 + $0x10] sm:$0xff]
    %v74 = vld [vmem:[#allocation3 + $0x18] sm:$0xff]
    %v75 = vld [vmem:[#allocation3 + $0x20] sm:$0xff]
    %v76 = vld [vmem:[#allocation3 + $0x28] sm:$0xff]
    %v77 = vld [vmem:[#allocation3 + $0x30] sm:$0xff]
    %v78 = vld [vmem:[#allocation3 + $0x38] sm:$0xff]
    %v79 = vld [vmem:[#allocation3 + $0x40] sm:$0xff]
    %v80 = vld [vmem:[#allocation3 + $0x48] sm:$0xff]
    %v81 = vld [vmem:[#allocation3 + $0x50] sm:$0xff]
    %v82 = vld [vmem:[#allocation3 + $0x58] sm:$0xff]
    %v83 = vld [vmem:[#allocation3 + $0x60] sm:$0xff]
    %v84 = vld [vmem:[#allocation3 + $0x68] sm:$0xff]
    %v85 = vld [vmem:[#allocation3 + $0x70] sm:$0xff]
    %v86 = vld [vmem:[#allocation3 + $0x78] sm:$0xff]
    %87 = vmatpush.msra.mxu0 %v86
    %88 = vmatpush.msra.mxu0 %v85
    %89 = vmatpush.msra.mxu0 %v84
    %90 = vmatpush.msra.mxu0 %v83
    %91 = vmatpush.msra.mxu0 %v82
    %92 = vmatpush.msra.mxu0 %v81
    %93 = vmatpush.msra.mxu0 %v80
    %94 = vmatpush.msra.mxu0 %v79
    %95 = vmatpush.msra.mxu0 %v78
    %96 = vmatpush.msra.mxu0 %v77
    %97 = vmatpush.msra.mxu0 %v76
    %98 = vmatpush.msra.mxu0 %v75
    %99 = vmatpush.msra.mxu0 %v74
    %100 = vmatpush.msra.mxu0 %v73
    %101 = vmatpush.msra.mxu0 %v72
    %102 = vmatpush.msra.mxu0 %v71
    %103 = vmatmul.f32.gmra.mxu0 %v69
    %v104 = vpop.f32.mrf.mxu0
    %v105 = vadd.f32 0.0, %v104
    %106 = vdwg.mxu0
    %v107 = vadd.f32 %v70, %v105
    %108 = vst [vmem:[#allocation2] sm:$0xff] %v107
    // Predicated region
    $region22: #{tpu_custom_call.1} parent=1 // pred_check
      %p109 = pneg %p31
    $region23: #{tpu_custom_call.1} parent=1 // pred_check_branch
      %111 = sbr.rel (%p109) target = $region25
    $region24: #{tpu_custom_call.1} parent=1 // pred_region
      %v112 = vld [vmem:[#allocation2] sm:$0xff]
      %v113 = vld [vmem:[%s2] sm:$0x1]
      %v115 = vperm.slane %v113, 0
      %v117 = vadd.f32 %v112, %v115
      %118 = vst [vmem:[#allocation6] sm:$0xff] %v117
    $region25: #{tpu_custom_call.1} parent=1 // pred_fallthru
      _
    // Predicated region
    $region26: #{tpu_custom_call.1} parent=1 // pred_check
      _
    $region27: #{tpu_custom_call.1} parent=1 // pred_check_branch
      %120 = sbr.rel (0) target = $region29
    $region28: #{tpu_custom_call.1} parent=1 // pred_region
      %122 = vsyncadd [#allocation5], 0
      %s124 = sshll.u32 [#allocation6], 4
      %s125 = int_to_ptr.vmem [resolvable:$true] %s124
      %s126 = sshll.u32 %s3, 4
      %s127 = int_to_ptr.hbm [resolvable:$true] %s126
      %129 = dma.vmem_to_hbm [thread:$0]  %s125, 128, %s127, [#allocation5]
    $region29: #{tpu_custom_call.1} parent=1 // pred_fallthru
      _
    // Predicated region
    $region30: #{tpu_custom_call.1} parent=1 // pred_check
      _
    $region31: #{tpu_custom_call.1} parent=1 // pred_check_branch
      %131 = sbr.rel (0) target = $region33
    $region32: #{tpu_custom_call.1} parent=1 // pred_region
      %133 = dma.done [#allocation5], 128
    $region33: #{tpu_custom_call.1} parent=1 // pred_fallthru
      _
    %134 = vsyncpa [#allocation4], 1
    %135 = vsyncpa [#allocation5], 1

</llo_original>
